<compile_context>
chip_gen: v6e
topology: v6e:2x2x1
jax: 0.10.0
libtpu: 0.0.40
codegen_flags: <defaults>
</compile_context>

<pallas_src>
import math

import jax
import jax.numpy as jnp
from jax import lax
from jax.experimental import pallas as pl
from jax.experimental.pallas import tpu as pltpu


_INV_SQRT2 = 1.0 / math.sqrt(2.0)


def _round_up(x, m):
    return ((x + m - 1) // m) * m


def _mlp_kernel(x_ref, w1_ref, b1_ref, w2_ref, b2_ref, o_ref, acc_ref):
    k = pl.program_id(1)

    @pl.when(k == 0)
    def _():
        acc_ref[...] = jnp.zeros_like(acc_ref)

    # fc1 chunk: (tm, D_in) @ (D_in, th) -> f32 on the MXU (bf16 operands)
    h = jnp.dot(x_ref[...], w1_ref[...], preferred_element_type=jnp.float32)
    h = h + b1_ref[...]                                  # bias in f32
    # exact (erf-based) GELU == torch.nn.GELU default; dropout(p=0) == identity
    h = 0.5 * h * (1.0 + lax.erf(h * _INV_SQRT2))
    # fc2 partial product for this H-chunk, accumulated in f32 VMEM scratch
    acc_ref[...] += jnp.dot(h.astype(w2_ref.dtype), w2_ref[...],
                            preferred_element_type=jnp.float32)

    @pl.when(k == pl.num_programs(1) - 1)
    def _():
        o_ref[...] = (acc_ref[...] + b2_ref[...]).astype(o_ref.dtype)


def mlp_pallas(x, w1, b1, w2, b2, *, tile_m=256, tile_h=512):
    """x: (B, N, D_in). w1: (D_in, H), b1: (H,), w2: (H, D_out), b2: (D_out,).

    Returns (B, N, D_out) in x.dtype. Matmuls run in bf16 with f32 accumulation.
    """
    orig_dtype = x.dtype
    B, N, D_in = x.shape
    H = w1.shape[1]
    D_out = w2.shape[1]
    M = B * N

    # Large row tiles, but never larger than the (8-aligned) row count.
    tile_m = min(tile_m, _round_up(M, 8))
    M_pad = _round_up(M, tile_m)

    # Hidden-dim reduction tiling (multiple of 128 for lane alignment).
    tile_h = min(tile_h, _round_up(H, 128))
    H_pad = _round_up(H, tile_h)

    # Lane-dense output: last dim a multiple of 128.
    D_out_pad = _round_up(D_out, 128)

    # Zero padding is mathematically neutral: padded H columns give
    # GELU(0 + 0) = 0 which meets zero W2 rows; padded rows/cols are sliced off.
    x2 = x.reshape(M, D_in)
    if M_pad != M:
        x2 = jnp.pad(x2, ((0, M_pad - M), (0, 0)))
    w1p = jnp.pad(w1, ((0, 0), (0, H_pad - H))) if H_pad != H else w1
    b1p = jnp.pad(b1, (0, H_pad - H)) if H_pad != H else b1
    if H_pad != H or D_out_pad != D_out:
        w2p = jnp.pad(w2, ((0, H_pad - H), (0, D_out_pad - D_out)))
    else:
        w2p = w2
    b2p = jnp.pad(b2, (0, D_out_pad - D_out)) if D_out_pad != D_out else b2

    # bf16 MXU operands, f32 biases.
    x_bf = x2.astype(jnp.bfloat16)
    w1_bf = w1p.astype(jnp.bfloat16)
    w2_bf = w2p.astype(jnp.bfloat16)
    b1_2 = b1p.reshape(1, H_pad).astype(jnp.float32)
    b2_2 = b2p.reshape(1, D_out_pad).astype(jnp.float32)

    grid = (M_pad // tile_m, H_pad // tile_h)

    out2 = pl.pallas_call(
        _mlp_kernel,
        out_shape=jax.ShapeDtypeStruct((M_pad, D_out_pad), orig_dtype),
        grid_spec=pltpu.PrefetchScalarGridSpec(
            num_scalar_prefetch=0,
            grid=grid,
            in_specs=[
                pl.BlockSpec((tile_m, D_in), lambda i, k: (i, 0)),      # x row tile
                pl.BlockSpec((D_in, tile_h), lambda i, k: (0, k)),      # W1 H-chunk
                pl.BlockSpec((1, tile_h), lambda i, k: (0, k)),         # b1 H-chunk
                pl.BlockSpec((tile_h, D_out_pad), lambda i, k: (k, 0)), # W2 H-chunk
                pl.BlockSpec((1, D_out_pad), lambda i, k: (0, 0)),      # b2
            ],
            out_specs=pl.BlockSpec((tile_m, D_out_pad), lambda i, k: (i, 0)),
            scratch_shapes=[pltpu.VMEM((tile_m, D_out_pad), jnp.float32)],
        ),
        compiler_params=pltpu.CompilerParams(
            dimension_semantics=("parallel", "arbitrary"),
            vmem_limit_bytes=48 * 1024 * 1024,
        ),
    )(x_bf, w1_bf, b1_2, w2_bf, b2_2)

    out2 = out2[:M, :D_out]
    return out2.reshape(B, N, D_out)


def _init_params(key, in_features, hidden_features, out_features):
    """Deterministic init mimicking nn.Linear defaults (uniform +/- 1/sqrt(fan_in))."""
    k1, k2, k3, k4 = jax.random.split(key, 4)
    lim1 = 1.0 / math.sqrt(in_features)
    lim2 = 1.0 / math.sqrt(hidden_features)
    # stored as (in, out) so the kernel does x @ W (equivalent to torch x @ W.T)
    w1 = jax.random.uniform(k1, (in_features, hidden_features),
                            jnp.float32, -lim1, lim1)
    b1 = jax.random.uniform(k2, (hidden_features,), jnp.float32, -lim1, lim1)
    w2 = jax.random.uniform(k3, (hidden_features, out_features),
                            jnp.float32, -lim2, lim2)
    b2 = jax.random.uniform(k4, (out_features,), jnp.float32, -lim2, lim2)
    return w1, b1, w2, b2


def _reference_bf16(x, w1, b1, w2, b2):
    """Same numerics as the kernel: bf16 MXU operands, f32 accumulation/bias/GELU."""
    h = jnp.dot(x.astype(jnp.bfloat16), w1.astype(jnp.bfloat16),
                preferred_element_type=jnp.float32) + b1
    h = 0.5 * h * (1.0 + lax.erf(h * _INV_SQRT2))
    o = jnp.dot(h.astype(jnp.bfloat16), w2.astype(jnp.bfloat16),
                preferred_element_type=jnp.float32) + b2
    return o


def _reference_f32(x, w1, b1, w2, b2):
    """Pure f32 semantics of the PyTorch module (drop=0.0)."""
    h = jnp.dot(x, w1) + b1
    h = 0.5 * h * (1.0 + lax.erf(h * _INV_SQRT2))
    return jnp.dot(h, w2) + b2


if __name__ == "__main__":
    # small ViT-like shapes: batch=2, seq=8, in=128, hidden=512 (4x), out=128
    # (tile_h=256 below forces two H-reduction steps to exercise the accumulator)
    B, N = 2, 8
    in_features, hidden_features, out_features = 128, 512, 128

    key = jax.random.PRNGKey(0)
    kx, kp = jax.random.split(key)
    x = jax.random.normal(kx, (B, N, in_features), jnp.float32)
    w1, b1, w2, b2 = _init_params(kp, in_features, hidden_features, out_features)

    out = mlp_pallas(x, w1, b1, w2, b2, tile_m=256, tile_h=256)
    out = jax.block_until_ready(out)

    assert out.shape == (B, N, out_features)

    # tight check against the bf16-matmul reference (same numerics as kernel)
    ref = _reference_bf16(x, w1, b1, w2, b2)
    assert jnp.allclose(out, ref, atol=1e-3, rtol=1e-3), "mismatch vs bf16 reference"

    # loose sanity check against the exact f32 module semantics
    ref32 = _reference_f32(x, w1, b1, w2, b2)
    assert float(jnp.max(jnp.abs(out - ref32))) < 5e-2, "too far from f32 reference"

    print("KERNEL_OK")
</pallas_src>

<mosaic_0001>
module attributes {stable_mosaic.version = 11 : i64} {
  func.func @_mlp_kernel(%arg0: i32, %arg1: i32, %arg2: memref<16x128xbf16, #tpu.memory_space<vmem>>, %arg3: memref<128x256xbf16, #tpu.memory_space<vmem>>, %arg4: memref<1x256xf32, #tpu.memory_space<vmem>>, %arg5: memref<256x128xbf16, #tpu.memory_space<vmem>>, %arg6: memref<1x128xf32, #tpu.memory_space<vmem>>, %arg7: memref<16x128xf32, #tpu.memory_space<vmem>>, %arg8: memref<16x128xf32, #tpu.memory_space<vmem>>) attributes {dimension_semantics = [#tpu.dimension_semantics<parallel>, #tpu.dimension_semantics<arbitrary>], iteration_bounds = array<i64: 1, 2>, scalar_prefetch = 0 : i64, scratch_operands = 1 : i64, tpu.core_type = #tpu.core_type<tc>, window_params = [{transform_indices = @transform_0, window_bounds = array<i64: 16, 128>}, {transform_indices = @transform_1, window_bounds = array<i64: 128, 256>}, {transform_indices = @transform_2, window_bounds = array<i64: 1, 256>}, {transform_indices = @transform_3, window_bounds = array<i64: 256, 128>}, {pipeline_mode = #tpu.pipeline_mode<synchronous>, transform_indices = @transform_4, window_bounds = array<i64: 1, 128>}, {transform_indices = @transform_5, window_bounds = array<i64: 16, 128>}]} {
    %c0_i32 = arith.constant 0 : i32
    %0 = arith.cmpi eq, %arg1, %c0_i32 : i32
    %1 = arith.extui %0 : i1 to i32
    %c0_i32_0 = arith.constant 0 : i32
    %2 = arith.cmpi ne, %1, %c0_i32_0 : i32
    scf.if %2 {
      %cst_17 = arith.constant 0.000000e+00 : f32
      %26 = vector.broadcast %cst_17 : f32 to vector<16x128xf32>
      %c0_18 = arith.constant 0 : index
      %c0_19 = arith.constant 0 : index
      %27 = vector.load %arg8[%c0_18, %c0_19] : memref<16x128xf32, #tpu.memory_space<vmem>>, vector<16x128xf32>
      tpu.vector_store %arg8[%c0_18, %c0_19], %26 {strides = array<i32>} : memref<16x128xf32, #tpu.memory_space<vmem>>, vector<16x128xf32>,
    } else {
    }
    %c0 = arith.constant 0 : index
    %c0_1 = arith.constant 0 : index
    %3 = vector.load %arg2[%c0, %c0_1] : memref<16x128xbf16, #tpu.memory_space<vmem>>, vector<16x128xbf16>
    %c0_2 = arith.constant 0 : index
    %c0_3 = arith.constant 0 : index
    %4 = vector.load %arg3[%c0_2, %c0_3] : memref<128x256xbf16, #tpu.memory_space<vmem>>, vector<128x256xbf16>
    %cst = arith.constant dense<0.000000e+00> : vector<16x256xf32>
    %5 = tpu.matmul %3, %4, %cst {dimension_numbers = #tpu.dot_dimension_numbers<[1], [0], [0], [1], [0, 0, 1, 1], [], []>} : vector<16x128xbf16>, vector<128x256xbf16>, vector<16x256xf32> -> vector<16x256xf32>
    %c0_4 = arith.constant 0 : index
    %c0_5 = arith.constant 0 : index
    %6 = vector.load %arg4[%c0_4, %c0_5] : memref<1x256xf32, #tpu.memory_space<vmem>>, vector<1x256xf32>
    %7 = vector.broadcast %6 : vector<1x256xf32> to vector<16x256xf32>
    %8 = arith.addf %5, %7 : vector<16x256xf32>
    %cst_6 = arith.constant 5.000000e-01 : f32
    %9 = vector.broadcast %cst_6 : f32 to vector<16x256xf32>
    %10 = arith.mulf %9, %8 : vector<16x256xf32>
    %cst_7 = arith.constant 0.707106769 : f32
    %11 = vector.broadcast %cst_7 : f32 to vector<16x256xf32>
    %12 = arith.mulf %8, %11 : vector<16x256xf32>
    %13 = math.erf %12 : vector<16x256xf32>
    %cst_8 = arith.constant 1.000000e+00 : f32
    %14 = vector.broadcast %cst_8 : f32 to vector<16x256xf32>
    %15 = arith.addf %14, %13 : vector<16x256xf32>
    %16 = arith.mulf %10, %15 : vector<16x256xf32>
    %c0_9 = arith.constant 0 : index
    %c0_10 = arith.constant 0 : index
    %17 = vector.load %arg8[%c0_9, %c0_10] : memref<16x128xf32, #tpu.memory_space<vmem>>, vector<16x128xf32>
    %18 = arith.truncf %16 : vector<16x256xf32> to vector<16x256xbf16>
    %c0_11 = arith.constant 0 : index
    %c0_12 = arith.constant 0 : index
    %19 = vector.load %arg5[%c0_11, %c0_12] : memref<256x128xbf16, #tpu.memory_space<vmem>>, vector<256x128xbf16>
    %cst_13 = arith.constant dense<0.000000e+00> : vector<16x128xf32>
    %20 = tpu.matmul %18, %19, %cst_13 {dimension_numbers = #tpu.dot_dimension_numbers<[1], [0], [0], [1], [0, 0, 1, 1], [], []>} : vector<16x256xbf16>, vector<256x128xbf16>, vector<16x128xf32> -> vector<16x128xf32>
    %21 = arith.addf %17, %20 : vector<16x128xf32>
    %c0_14 = arith.constant 0 : index
    %c0_15 = arith.constant 0 : index
    %22 = vector.load %arg8[%c0_14, %c0_15] : memref<16x128xf32, #tpu.memory_space<vmem>>, vector<16x128xf32>
    tpu.vector_store %arg8[%c0_14, %c0_15], %21 {strides = array<i32>} : memref<16x128xf32, #tpu.memory_space<vmem>>, vector<16x128xf32>,
    %c1_i32 = arith.constant 1 : i32
    %23 = arith.cmpi eq, %arg1, %c1_i32 : i32
    %24 = arith.extui %23 : i1 to i32
    %c0_i32_16 = arith.constant 0 : i32
    %25 = arith.cmpi ne, %24, %c0_i32_16 : i32
    scf.if %25 {
      %c0_17 = arith.constant 0 : index
      %c0_18 = arith.constant 0 : index
      %26 = vector.load %arg8[%c0_17, %c0_18] : memref<16x128xf32, #tpu.memory_space<vmem>>, vector<16x128xf32>
      %c0_19 = arith.constant 0 : index
      %c0_20 = arith.constant 0 : index
      %27 = vector.load %arg6[%c0_19, %c0_20] : memref<1x128xf32, #tpu.memory_space<vmem>>, vector<1x128xf32>
      %28 = vector.broadcast %27 : vector<1x128xf32> to vector<16x128xf32>
      %29 = arith.addf %26, %28 : vector<16x128xf32>
      %c0_21 = arith.constant 0 : index
      %c0_22 = arith.constant 0 : index
      %30 = vector.load %arg7[%c0_21, %c0_22] : memref<16x128xf32, #tpu.memory_space<vmem>>, vector<16x128xf32>
      tpu.vector_store %arg7[%c0_21, %c0_22], %29 {strides = array<i32>} : memref<16x128xf32, #tpu.memory_space<vmem>>, vector<16x128xf32>,
    } else {
    }
    return
  }
  func.func @transform_0(%arg0: i32, %arg1: i32) -> (i32, i32) {
    %c0_i32 = arith.constant 0 : i32
    %c0_i32_0 = arith.constant 0 : i32
    return %arg0, %c0_i32 : i32, i32
  }
  func.func @transform_1(%arg0: i32, %arg1: i32) -> (i32, i32) {
    %c0_i32 = arith.constant 0 : i32
    %c0_i32_0 = arith.constant 0 : i32
    return %c0_i32, %arg1 : i32, i32
  }
  func.func @transform_2(%arg0: i32, %arg1: i32) -> (i32, i32) {
    %c0_i32 = arith.constant 0 : i32
    %c0_i32_0 = arith.constant 0 : i32
    return %c0_i32, %arg1 : i32, i32
  }
  func.func @transform_3(%arg0: i32, %arg1: i32) -> (i32, i32) {
    %c0_i32 = arith.constant 0 : i32
    %c0_i32_0 = arith.constant 0 : i32
    return %arg1, %c0_i32 : i32, i32
  }
  func.func @transform_4(%arg0: i32, %arg1: i32) -> (i32, i32) {
    %c0_i32 = arith.constant 0 : i32
    %c0_i32_0 = arith.constant 0 : i32
    %c0_i32_1 = arith.constant 0 : i32
    return %c0_i32, %c0_i32_0 : i32, i32
  }
  func.func @transform_5(%arg0: i32, %arg1: i32) -> (i32, i32) {
    %c0_i32 = arith.constant 0 : i32
    %c0_i32_0 = arith.constant 0 : i32
    return %arg0, %c0_i32 : i32, i32
  }
}

</mosaic_0001>

<llo_original>
// kernel: tpu_custom_call.1
$region0: #{tpu_custom_call.1}
  #allocation0 [shape = 'u32[]', space=smem, size = 0x4, offset = 0x4, fixed_abs, tag = 'smem constant byte address 0x4 - core index']
  #allocation1 [shape = 'u32[144,128]{1,0:T(1,128)}', space=vmem, size = 0x12000, scoped, tag = 'internal scratch']
  #allocation2 [shape = 'f32[16,128]{1,0:T(8,128)}', space=vmem, size = 0x2000, scoped, tag = 'scratch operand']
  %s0 = inlined_call_operand.hbm [shape: bf16[16,128], index: 0, kind: input, shape index: {}]
  %s1 = inlined_call_operand.hbm [shape: bf16[128,512], index: 1, kind: input, shape index: {}]
  %s2 = inlined_call_operand.hbm [shape: f32[1,512], index: 2, kind: input, shape index: {}]
  %s3 = inlined_call_operand.hbm [shape: bf16[512,128], index: 3, kind: input, shape index: {}]
  %s4 = inlined_call_operand.vmem [shape: f32[1,128], index: 4, kind: input, shape index: {}]
  %s5 = inlined_call_operand.hbm [shape: f32[16,128], index: 5, kind: output, shape index: {}]
  %s6 = sld [smem:[#allocation0]]
  $region77: #{tpu_custom_call.1} parent=0
    _
  %s8 = ssub.s32 1, %s6
  %s9 = scalar_select 0, %s8, %s6
  $region1: #{tpu_custom_call.1} parent=0
    #allocation3 [shape = 'u8[4096]{0}', space=vmem, size = 0x1000, scoped, tag = 'input window, operand 0, single buffered']
    #allocation4 [shape = 's32[2]{0}', space=sflag, size = 0x8, scoped, tag = 'scoped memory for tpu_custom_call.1']
    #allocation5 [shape = 's32[2]{0}', space=sflag, size = 0x8, scoped, tag = 'scoped memory for tpu_custom_call.1']
    #allocation6 [shape = 'u8[131072]{0}', space=vmem, size = 0x20000, scoped, tag = 'input window, operand 1']
    #allocation7 [shape = 's32[2]{0}', space=sflag, size = 0x8, scoped, tag = 'scoped memory for tpu_custom_call.1']
    #allocation8 [shape = 'u8[2048]{0}', space=vmem, size = 0x800, scoped, tag = 'input window, operand 2']
    #allocation9 [shape = 'u8[131072]{0}', space=vmem, size = 0x20000, scoped, tag = 'input window, operand 3']
    #allocation10 [shape = 's32[2]{0}', space=sflag, size = 0x8, scoped, tag = 'scoped memory for tpu_custom_call.1']
    #allocation11 [shape = 'u8[8192]{0}', space=vmem, size = 0x2000, scoped, tag = 'output window, operand 0, single buffered']
    %10 = vsyncpa [#allocation4], 0
    %11 = vsyncpa [#allocation7], 0
    %s12 = scalar_lea.sflag [#allocation7], 1
    %13 = vsyncpa %s12, 0
    %14 = vsyncpa [#allocation10], 0
    %s15 = scalar_lea.sflag [#allocation10], 1
    %16 = vsyncpa %s15, 0
    %17 = vsyncpa [#allocation5], 0
    loop: start=0, step=1, limit=4
    $region2: #{tpu_custom_call.1} parent=1 // loop_pre_header
      _
    $region3: #{tpu_custom_call.1} parent=1 // loop_header
      %s19 = sphi 0, %s23
      %p20 = scmp.ge.s32.totalorder %s19, 4
      %s26 = sphi 0, %s38
      %s27 = sphi 0, %s34
      %s28 = sphi 0, %s26
      %s29 = sphi 0, %s27
      %s30 = sphi 0, %s28
      %s31 = sphi 0, %s29
      %s41 = sphi 0, %s43
      %s44 = sphi 0, %s41
      %s45 = sphi 0, %s44
      %s61 = sphi 0, %s45
      %s67 = sphi 0, %s69
      %s70 = sphi 0, %s67
      %s71 = sphi 0, %s70
      %s87 = sphi 0, %s71
      %s93 = sphi 0, %s95
      %s96 = sphi 0, %s93
      %s97 = sphi 0, %s96
      %s113 = sphi 0, %s97
      %s119 = sphi 0, %s121
      %s122 = sphi 0, %s119
      %s123 = sphi 0, %s122
      %s139 = sphi 0, %s123
      %s143 = sphi 0, %s143
      %s145 = sphi 0, %s143
      %s146 = sphi 0, %s145
      %s160 = sphi 0, %s146
      %s166 = sphi 0, %s168
      %s169 = sphi 0, %s166
      %s170 = sphi 0, %s169
      %s186 = sphi 0, %s170
    $region4: #{tpu_custom_call.1} parent=1 // loop_header_branch
      %22 = sbr.rel (%p20) target = $region8
    $region5: #{tpu_custom_call.1} parent=1 // loop_body
      %s24 = ssub.s32 %s19, 1
      %s25 = ssub.s32 %s19, 2
      %s32 = sadd.s32 1, %s27
      %p33 = scmp.ge.s32.totalorder %s32, 2
      %s34 = scalar_select %p33, 0, %s32
      %s35 = sadd.s32 1, %s26
      %s36 = scalar_select %p33, %s35, %s26
      %p37 = scmp.ge.s32.totalorder %s36, 1
      %s38 = scalar_select %p37, 0, %s36
      %s39 = ssub.s32 %s26, %s38
      %p40 = scmp.eq.s32.totalorder %s39, 0
      %s42 = sadd.s32 %s41, 1
      %s43 = scalar_select %p40, %s41, %s42
      %p46 = pneg %p40
      %p47 = scmp.eq.s32.totalorder %s19, 1
      %p48 = por %p46, %p47
      %p49 = scmp.ne.s32.totalorder %s41, %s44
      %p50 = scmp.eq.s32.totalorder %s19, 0
      %p51 = por %p49, %p50
      %p52 = scmp.ne.s32.totalorder %s41, %s44
      %p53 = scmp.eq.s32.totalorder %s24, 1
      %p54 = por %p52, %p53
      %p55 = scmp.ne.s32.totalorder %s44, %s45
      %p56 = scmp.eq.s32.totalorder %s24, 0
      %p57 = por %p55, %p56
      %p58 = scmp.ne.s32.totalorder %s44, %s45
      %p59 = scmp.eq.s32.totalorder %s25, 1
      %p60 = por %p58, %p59
      %p62 = scmp.ne.s32.totalorder %s45, %s61
      %p63 = scmp.eq.s32.totalorder %s25, 0
      %p64 = por %p62, %p63
      %s65 = ssub.s32 %s27, %s34
      %p66 = scmp.eq.s32.totalorder %s65, 0
      %s68 = sadd.s32 %s67, 1
      %s69 = scalar_select %p66, %s67, %s68
      %p72 = pneg %p66
      %p73 = scmp.eq.s32.totalorder %s19, 1
      %p74 = por %p72, %p73
      %p75 = scmp.ne.s32.totalorder %s67, %s70
      %p76 = scmp.eq.s32.totalorder %s19, 0
      %p77 = por %p75, %p76
      %p78 = scmp.ne.s32.totalorder %s67, %s70
      %p79 = scmp.eq.s32.totalorder %s24, 1
      %p80 = por %p78, %p79
      %p81 = scmp.ne.s32.totalorder %s70, %s71
      %p82 = scmp.eq.s32.totalorder %s24, 0
      %p83 = por %p81, %p82
      %p84 = scmp.ne.s32.totalorder %s70, %s71
      %p85 = scmp.eq.s32.totalorder %s25, 1
      %p86 = por %p84, %p85
      %p88 = scmp.ne.s32.totalorder %s71, %s87
      %p89 = scmp.eq.s32.totalorder %s25, 0
      %p90 = por %p88, %p89
      %s91 = ssub.s32 %s27, %s34
      %p92 = scmp.eq.s32.totalorder %s91, 0
      %s94 = sadd.s32 %s93, 1
      %s95 = scalar_select %p92, %s93, %s94
      %p98 = pneg %p92
      %p99 = scmp.eq.s32.totalorder %s19, 1
      %p100 = por %p98, %p99
      %p101 = scmp.ne.s32.totalorder %s93, %s96
      %p102 = scmp.eq.s32.totalorder %s19, 0
      %p103 = por %p101, %p102
      %p104 = scmp.ne.s32.totalorder %s93, %s96
      %p105 = scmp.eq.s32.totalorder %s24, 1
      %p106 = por %p104, %p105
      %p107 = scmp.ne.s32.totalorder %s96, %s97
      %p108 = scmp.eq.s32.totalorder %s24, 0
      %p109 = por %p107, %p108
      %p110 = scmp.ne.s32.totalorder %s96, %s97
      %p111 = scmp.eq.s32.totalorder %s25, 1
      %p112 = por %p110, %p111
      %p114 = scmp.ne.s32.totalorder %s97, %s113
      %p115 = scmp.eq.s32.totalorder %s25, 0
      %p116 = por %p114, %p115
      %s117 = ssub.s32 %s27, %s34
      %p118 = scmp.eq.s32.totalorder %s117, 0
      %s120 = sadd.s32 %s119, 1
      %s121 = scalar_select %p118, %s119, %s120
      %p124 = pneg %p118
      %p125 = scmp.eq.s32.totalorder %s19, 1
      %p126 = por %p124, %p125
      %p127 = scmp.ne.s32.totalorder %s119, %s122
      %p128 = scmp.eq.s32.totalorder %s19, 0
      %p129 = por %p127, %p128
      %p130 = scmp.ne.s32.totalorder %s119, %s122
      %p131 = scmp.eq.s32.totalorder %s24, 1
      %p132 = por %p130, %p131
      %p133 = scmp.ne.s32.totalorder %s122, %s123
      %p134 = scmp.eq.s32.totalorder %s24, 0
      %p135 = por %p133, %p134
      %p136 = scmp.ne.s32.totalorder %s122, %s123
      %p137 = scmp.eq.s32.totalorder %s25, 1
      %p138 = por %p136, %p137
      %p140 = scmp.ne.s32.totalorder %s123, %s139
      %p141 = scmp.eq.s32.totalorder %s25, 0
      %p142 = por %p140, %p141
      %s144 = sadd.s32 %s143, 1
      %p147 = scmp.eq.s32.totalorder %s19, 1
      %p148 = scmp.ne.s32.totalorder %s143, %s145
      %p149 = scmp.eq.s32.totalorder %s19, 0
      %p150 = por %p148, %p149
      %p151 = scmp.ne.s32.totalorder %s143, %s145
      %p152 = scmp.eq.s32.totalorder %s24, 1
      %p153 = por %p151, %p152
      %p154 = scmp.ne.s32.totalorder %s145, %s146
      %p155 = scmp.eq.s32.totalorder %s24, 0
      %p156 = por %p154, %p155
      %p157 = scmp.ne.s32.totalorder %s145, %s146
      %p158 = scmp.eq.s32.totalorder %s25, 1
      %p159 = por %p157, %p158
      %p161 = scmp.ne.s32.totalorder %s146, %s160
      %p162 = scmp.eq.s32.totalorder %s25, 0
      %p163 = por %p161, %p162
      %s164 = ssub.s32 %s26, %s38
      %p165 = scmp.eq.s32.totalorder %s164, 0
      %s167 = sadd.s32 %s166, 1
      %s168 = scalar_select %p165, %s166, %s167
      %p171 = pneg %p165
      %p172 = scmp.eq.s32.totalorder %s19, 1
      %p173 = por %p171, %p172
      %p174 = scmp.ne.s32.totalorder %s166, %s169
      %p175 = scmp.eq.s32.totalorder %s19, 0
      %p176 = por %p174, %p175
      %p177 = scmp.ne.s32.totalorder %s166, %s169
      %p178 = scmp.eq.s32.totalorder %s24, 1
      %p179 = por %p177, %p178
      %p180 = scmp.ne.s32.totalorder %s169, %s170
      %p181 = scmp.eq.s32.totalorder %s24, 0
      %p182 = por %p180, %p181
      %p183 = scmp.ne.s32.totalorder %s169, %s170
      %p184 = scmp.eq.s32.totalorder %s25, 1
      %p185 = por %p183, %p184
      %p187 = scmp.ne.s32.totalorder %s170, %s186
      %p188 = scmp.eq.s32.totalorder %s25, 0
      %p189 = por %p187, %p188
      %p190 = scmp.le.s32.totalorder 1, %s19
      %p191 = scmp.lt.s32.totalorder %s19, 3
      %p192 = pnand %p190, %p191
      %p193 = pneg %p192
      // Predicated region
      $region9: #{tpu_custom_call.1} parent=5 // pred_check
        _
      $region10: #{tpu_custom_call.1} parent=5 // pred_check_branch
        %195 = sbr.rel (%p192) target = $region12
      $region11: #{tpu_custom_call.1} parent=5 // pred_region
        %s196 = ssub.s32 %s19, 1
        // Predicated region
        $region13: #{tpu_custom_call.1} parent=11 // pred_check
          %p197 = pneg %p57
        $region14: #{tpu_custom_call.1} parent=11 // pred_check_branch
          %199 = sbr.rel (%p197) target = $region16
        $region15: #{tpu_custom_call.1} parent=11 // pred_region
          %s200 = smul.u32 2, %s28
          %s202 = ssub.s32 128, 128
          %203 = vsyncadd [#allocation4], %s202
          %s204 = smul.addr %s200, 64
          %s205 = scalar_lea.hbm %s0, %s204
          %s206 = sshll.u32 [#allocation3], 4
          %s207 = int_to_ptr.vmem [resolvable:$true] %s206
          %212 = dma.hbm_to_vmem [thread:$0]  %s205, 128, %s207, [#allocation4], 64, 64, 4
        $region16: #{tpu_custom_call.1} parent=11 // pred_fallthru
          _
        // Predicated region
        $region17: #{tpu_custom_call.1} parent=11 // pred_check
          %p213 = pneg %p156
        $region18: #{tpu_custom_call.1} parent=11 // pred_check_branch
          %215 = sbr.rel (%p213) target = $region20
        $region19: #{tpu_custom_call.1} parent=11 // pred_region
          _
        $region20: #{tpu_custom_call.1} parent=11 // pred_fallthru
          _
      $region12: #{tpu_custom_call.1} parent=5 // pred_fallthru
        _
      %p216 = scmp.lt.s32.totalorder %s19, 2
      // Predicated region
      $region21: #{tpu_custom_call.1} parent=5 // pred_check
        %p217 = pneg %p216
      $region22: #{tpu_custom_call.1} parent=5 // pred_check_branch
        %219 = sbr.rel (%p217) target = $region24
      $region23: #{tpu_custom_call.1} parent=5 // pred_region
        // Predicated region
        $region25: #{tpu_custom_call.1} parent=23 // pred_check
          %p220 = pneg %p77
        $region26: #{tpu_custom_call.1} parent=23 // pred_check_branch
          %222 = sbr.rel (%p220) target = $region28
        $region27: #{tpu_custom_call.1} parent=23 // pred_region
          %s223 = sand.u32 %s19, 1
          %s224 = scalar_lea.sflag [#allocation7], %s223
          %s225 = sand.u32 %s67, 1
          %s226 = smul.addr %s225, 128
          %s227 = scalar_lea.vmem [#allocation6], %s226
          %s228 = smul.u32 2, %s27
          %s230 = ssub.s32 2048, 2048
          %231 = vsyncadd %s224, %s230
          %s232 = smul.addr %s228, 64
          %s233 = scalar_lea.hbm %s1, %s232
          %s234 = sshll.u32 %s227, 4
          %s235 = int_to_ptr.vmem [resolvable:$true] %s234
          %240 = dma.hbm_to_vmem [thread:$0]  %s233, 2048, %s235, %s224, 256, 128, 8
        $region28: #{tpu_custom_call.1} parent=23 // pred_fallthru
          _
        // Predicated region
        $region29: #{tpu_custom_call.1} parent=23 // pred_check
          %p241 = pneg %p103
        $region30: #{tpu_custom_call.1} parent=23 // pred_check_branch
          %243 = sbr.rel (%p241) target = $region32
        $region31: #{tpu_custom_call.1} parent=23 // pred_region
          %s244 = sand.u32 %s19, 1
          %s245 = scalar_lea.sflag [#allocation7], %s244
          %s246 = sand.u32 %s93, 1
          %s247 = smul.addr %s246, 2
          %s248 = scalar_lea.vmem [#allocation8], %s247
          %s249 = smul.u32 2, %s27
          %s251 = ssub.s32 32, 32
          %252 = vsyncadd %s245, %s251
          %s253 = smul.addr %s249, 16
          %s254 = scalar_lea.hbm %s2, %s253
          %s256 = sshll.u32 %s248, 4
          %s257 = int_to_ptr.vmem [resolvable:$true] %s256
          %259 = dma.hbm_to_vmem [thread:$0]  %s254, 32, %s257, %s245
        $region32: #{tpu_custom_call.1} parent=23 // pred_fallthru
          _
        // Predicated region
        $region33: #{tpu_custom_call.1} parent=23 // pred_check
          %p260 = pneg %p129
        $region34: #{tpu_custom_call.1} parent=23 // pred_check_branch
          %262 = sbr.rel (%p260) target = $region36
        $region35: #{tpu_custom_call.1} parent=23 // pred_region
          %s263 = sand.u32 %s119, 1
          %s264 = scalar_lea.sflag [#allocation10], %s263
          %s265 = sand.u32 %s119, 1
          %s266 = smul.addr %s265, 128
          %s267 = scalar_lea.vmem [#allocation9], %s266
          %s268 = smul.u32 32, %s27
          %s270 = ssub.s32 2048, 2048
          %271 = vsyncadd %s264, %s270
          %s272 = smul.addr %s268, 64
          %s273 = scalar_lea.hbm %s3, %s272
          %s274 = sshll.u32 %s267, 4
          %s275 = int_to_ptr.vmem [resolvable:$true] %s274
          %280 = dma.hbm_to_vmem [thread:$0]  %s273, 2048, %s275, %s264, 64, 64, 4
        $region36: #{tpu_custom_call.1} parent=23 // pred_fallthru
          _
      $region24: #{tpu_custom_call.1} parent=5 // pred_fallthru
        _
      %p281 = scmp.le.s32.totalorder 1, %s19
      %p282 = scmp.lt.s32.totalorder %s19, 3
      %p283 = pnand %p281, %p282
      %p284 = pneg %p283
      // Predicated region
      $region37: #{tpu_custom_call.1} parent=5 // pred_check
        _
      $region38: #{tpu_custom_call.1} parent=5 // pred_check_branch
        %286 = sbr.rel (%p283) target = $region40
      $region39: #{tpu_custom_call.1} parent=5 // pred_region
        %s287 = ssub.s32 %s19, 1
        // Predicated region
        $region41: #{tpu_custom_call.1} parent=39 // pred_check
          %p288 = pneg %p57
        $region42: #{tpu_custom_call.1} parent=39 // pred_check_branch
          %290 = sbr.rel (%p288) target = $region44
        $region43: #{tpu_custom_call.1} parent=39 // pred_region
          %291 = dma.done [#allocation4], 128
        $region44: #{tpu_custom_call.1} parent=39 // pred_fallthru
          _
        %s292 = sand.u32 %s24, 1
        %s293 = scalar_lea.sflag [#allocation7], %s292
        %s294 = sand.u32 %s70, 1
        %s295 = smul.addr %s294, 128
        %s296 = scalar_lea.vmem [#allocation6], %s295
        // Predicated region
        $region45: #{tpu_custom_call.1} parent=39 // pred_check
          %p297 = pneg %p83
        $region46: #{tpu_custom_call.1} parent=39 // pred_check_branch
          %299 = sbr.rel (%p297) target = $region48
        $region47: #{tpu_custom_call.1} parent=39 // pred_region
          %300 = dma.done %s293, 2048
        $region48: #{tpu_custom_call.1} parent=39 // pred_fallthru
          _
        %s301 = sand.u32 %s24, 1
        %s302 = scalar_lea.sflag [#allocation7], %s301
        %s303 = sand.u32 %s96, 1
        %s304 = smul.addr %s303, 2
        %s305 = scalar_lea.vmem [#allocation8], %s304
        // Predicated region
        $region49: #{tpu_custom_call.1} parent=39 // pred_check
          %p306 = pneg %p109
        $region50: #{tpu_custom_call.1} parent=39 // pred_check_branch
          %308 = sbr.rel (%p306) target = $region52
        $region51: #{tpu_custom_call.1} parent=39 // pred_region
          %309 = dma.done %s302, 32
        $region52: #{tpu_custom_call.1} parent=39 // pred_fallthru
          _
        %s310 = sand.u32 %s122, 1
        %s311 = scalar_lea.sflag [#allocation10], %s310
        %s312 = sand.u32 %s122, 1
        %s313 = smul.addr %s312, 128
        %s314 = scalar_lea.vmem [#allocation9], %s313
        // Predicated region
        $region53: #{tpu_custom_call.1} parent=39 // pred_check
          %p315 = pneg %p135
        $region54: #{tpu_custom_call.1} parent=39 // pred_check_branch
          %317 = sbr.rel (%p315) target = $region56
        $region55: #{tpu_custom_call.1} parent=39 // pred_region
          %318 = dma.done %s311, 2048
        $region56: #{tpu_custom_call.1} parent=39 // pred_fallthru
          _
        %p319 = pneg %p57
        %p320 = pneg %p54
        %s321 = sand.u32 %s24, 1
        %s322 = scalar_lea.sflag [#allocation7], %s321
        %s323 = sand.u32 %s70, 1
        %s324 = smul.addr %s323, 128
        %s325 = scalar_lea.vmem [#allocation6], %s324
        %p326 = pneg %p83
        %p327 = pneg %p80
        %s328 = sand.u32 %s24, 1
        %s329 = scalar_lea.sflag [#allocation7], %s328
        %s330 = sand.u32 %s96, 1
        %s331 = smul.addr %s330, 2
        %s332 = scalar_lea.vmem [#allocation8], %s331
        %p333 = pneg %p109
        %p334 = pneg %p106
        %s335 = sand.u32 %s122, 1
        %s336 = scalar_lea.sflag [#allocation10], %s335
        %s337 = sand.u32 %s122, 1
        %s338 = smul.addr %s337, 128
        %s339 = scalar_lea.vmem [#allocation9], %s338
        %p340 = pneg %p135
        %p341 = pneg %p132
        %p342 = pneg %p156
        %p343 = pneg %p153
        %p344 = pneg %p182
        %p345 = pneg %p179
        %s346 = smul.u32 2, %s28
        %s347 = smul.u32 2, %s29
        %s348 = smul.u32 2, %s29
        %s349 = smul.u32 32, %s29
        %s350 = smul.u32 2, %s28
        %p352 = scmp.eq.s32.totalorder %s29, 0
        // Predicated region
        $region57: #{tpu_custom_call.1} parent=39 // pred_check
          %p353 = pneg %p352
        $region58: #{tpu_custom_call.1} parent=39 // pred_check_branch
          %355 = sbr.rel (%p353) target = $region60
        $region59: #{tpu_custom_call.1} parent=39 // pred_region
          %356 = vst [vmem:[#allocation2] sm:$0xff] 0.0
          %357 = vst [vmem:[#allocation2 + $0x8] sm:$0xff] 0.0
        $region60: #{tpu_custom_call.1} parent=39 // pred_fallthru
          _
        %v358 = vld [vmem:[#allocation3] sm:$0xf]
        %v359 = vld [vmem:[#allocation3 + $0x4] sm:$0xf]
        %v360 = vld [vmem:[%s296] sm:$0xff]
        %v361 = vld [vmem:[%s296 + $0x8] sm:$0xff]
        %v362 = vld [vmem:[%s296 + $0x10] sm:$0xff]
        %v363 = vld [vmem:[%s296 + $0x18] sm:$0xff]
        %v364 = vld [vmem:[%s296 + $0x20] sm:$0xff]
        %v365 = vld [vmem:[%s296 + $0x28] sm:$0xff]
        %v366 = vld [vmem:[%s296 + $0x30] sm:$0xff]
        %v367 = vld [vmem:[%s296 + $0x38] sm:$0xff]
        %v368 = vld [vmem:[%s296 + $0x40] sm:$0xff]
        %v369 = vld [vmem:[%s296 + $0x48] sm:$0xff]
        %v370 = vld [vmem:[%s296 + $0x50] sm:$0xff]
        %v371 = vld [vmem:[%s296 + $0x58] sm:$0xff]
        %v372 = vld [vmem:[%s296 + $0x60] sm:$0xff]
        %v373 = vld [vmem:[%s296 + $0x68] sm:$0xff]
        %v374 = vld [vmem:[%s296 + $0x70] sm:$0xff]
        %v375 = vld [vmem:[%s296 + $0x78] sm:$0xff]
        %v376 = vld [vmem:[%s305] sm:$0x3]
        %v378 = vlaneseq
        %v379 = vshrl.u32 %v378, 7
        %v380 = vsub.s32 0, %v379
        %v381 = vrot.slane %v376, %v380
        %v382 = vlaneseq
        %v383 = vshrl.u32 %v382, 7
        %v384 = vsub.s32 1, %v383
        %v385 = vrot.slane %v376, %v384
        %v390 = vunpack.c.l.b16 %v358
        %v391 = vunpack.c.l.b16 %v359
        %v392 = vpack.c.b16 %v391, %v390
        %v410 = vunpack.c.l.b16 %v360
        %v411 = vunpack.c.h.b16 %v360
        %v412 = vunpack.c.l.b16 %v361
        %v413 = vunpack.c.h.b16 %v361
        %v414 = vunpack.c.l.b16 %v362
        %v415 = vunpack.c.h.b16 %v362
        %v416 = vunpack.c.l.b16 %v363
        %v417 = vunpack.c.h.b16 %v363
        %v418 = vunpack.c.l.b16 %v364
        %v419 = vunpack.c.h.b16 %v364
        %v420 = vunpack.c.l.b16 %v365
        %v421 = vunpack.c.h.b16 %v365
        %v422 = vunpack.c.l.b16 %v366
        %v423 = vunpack.c.h.b16 %v366
        %v424 = vunpack.c.l.b16 %v367
        %v425 = vunpack.c.h.b16 %v367
        %v426 = vunpack.c.l.b16 %v368
        %v427 = vunpack.c.h.b16 %v368
        %v428 = vunpack.c.l.b16 %v369
        %v429 = vunpack.c.h.b16 %v369
        %v430 = vunpack.c.l.b16 %v370
        %v431 = vunpack.c.h.b16 %v370
        %v432 = vunpack.c.l.b16 %v371
        %v433 = vunpack.c.h.b16 %v371
        %v434 = vunpack.c.l.b16 %v372
        %v435 = vunpack.c.h.b16 %v372
        %v436 = vunpack.c.l.b16 %v373
        %v437 = vunpack.c.h.b16 %v373
        %v438 = vunpack.c.l.b16 %v374
        %v439 = vunpack.c.h.b16 %v374
        %v440 = vunpack.c.l.b16 %v375
        %v441 = vunpack.c.h.b16 %v375
        %v442 = vpack.c.b16 %v412, %v410
        %v443 = vpack.c.b16 %v413, %v411
        %v444 = vpack.c.b16 %v416, %v414
        %v445 = vpack.c.b16 %v417, %v415
        %v446 = vpack.c.b16 %v420, %v418
        %v447 = vpack.c.b16 %v421, %v419
        %v448 = vpack.c.b16 %v424, %v422
        %v449 = vpack.c.b16 %v425, %v423
        %v450 = vpack.c.b16 %v428, %v426
        %v451 = vpack.c.b16 %v429, %v427
        %v452 = vpack.c.b16 %v432, %v430
        %v453 = vpack.c.b16 %v433, %v431
        %v454 = vpack.c.b16 %v436, %v434
        %v455 = vpack.c.b16 %v437, %v435
        %v456 = vpack.c.b16 %v440, %v438
        %v457 = vpack.c.b16 %v441, %v439
        %474 = vmatprep.subr.bf16.mxu0 %v457
        %475 = vmatpush1.bf16.msra.mxu0 %v456
        %476 = vmatprep.subr.bf16.mxu0 %v455
        %477 = vmatpush1.bf16.msra.mxu0 %v454
        %478 = vmatprep.subr.bf16.mxu0 %v453
        %479 = vmatpush1.bf16.msra.mxu0 %v452
        %480 = vmatprep.subr.bf16.mxu0 %v451
        %481 = vmatpush1.bf16.msra.mxu0 %v450
        %482 = vmatprep.subr.bf16.mxu0 %v449
        %483 = vmatpush1.bf16.msra.mxu0 %v448
        %484 = vmatprep.subr.bf16.mxu0 %v447
        %485 = vmatpush1.bf16.msra.mxu0 %v446
        %486 = vmatprep.subr.bf16.mxu0 %v445
        %487 = vmatpush1.bf16.msra.mxu0 %v444
        %488 = vmatprep.subr.bf16.mxu0 %v443
        %489 = vmatpush1.bf16.msra.mxu0 %v442
        %490 = vmatprep.subr.bf16.mxu0 0
        %491 = vmatpush2.bf16.msra.mxu0 0
        %492 = vmatprep.subr.bf16.mxu0 0
        %493 = vmatpush2.bf16.msra.mxu0 0
        %494 = vmatprep.subr.bf16.mxu0 0
        %495 = vmatpush2.bf16.msra.mxu0 0
        %496 = vmatprep.subr.bf16.mxu0 0
        %497 = vmatpush2.bf16.msra.mxu0 0
        %498 = vmatprep.subr.bf16.mxu0 0
        %499 = vmatpush2.bf16.msra.mxu0 0
        %500 = vmatprep.subr.bf16.mxu0 0
        %501 = vmatpush2.bf16.msra.mxu0 0
        %502 = vmatprep.subr.bf16.mxu0 0
        %503 = vmatpush2.bf16.msra.mxu0 0
        %504 = vmatprep.subr.bf16.mxu0 0
        %505 = vmatpush2.bf16.msra.mxu0 0
        %506 = vmatprep.mubr.bf16.mxu0 0
        %507 = vmatmul.mubr.bf16.gmra.mxu0 %v392
        %v508 = vpop.f32.mrf.mxu0
        %v509 = vadd.f32 %v381, %v508
        %v510 = vpop.f32.mrf.mxu0
        %v511 = vadd.f32 %v385, %v510
        %v512 = vpop.f32.mrf.mxu0
        %v513 = vadd.f32 %v381, %v512
        %v514 = vpop.f32.mrf.mxu0
        %v515 = vadd.f32 %v385, %v514
        %516 = vdwg.mxu0
        %v517 = vmul.f32 %v509, 0.5
        %v518 = vmul.f32 %v511, 0.5
        %v519 = vmul.f32 %v513, 0.5
        %v520 = vmul.f32 %v515, 0.5
        %v521 = vmul.f32 %v509, 0.70710677
        %v522 = vmul.f32 %v511, 0.70710677
        %v523 = vmul.f32 %v513, 0.70710677
        %v524 = vmul.f32 %v515, 0.70710677
        %v525 = verf.f32.pop %v521
        %v526 = verf.f32.pop %v522
        %v527 = verf.f32.pop %v523
        %v528 = verf.f32.pop %v524
        %v529 = vadd.f32 %v525, 1.0
        %v530 = vadd.f32 %v526, 1.0
        %v531 = vadd.f32 %v527, 1.0
        %v532 = vadd.f32 %v528, 1.0
        %v533 = vmul.f32 %v517, %v529
        %v534 = vmul.f32 %v518, %v530
        %v535 = vmul.f32 %v519, %v531
        %v536 = vmul.f32 %v520, %v532
        %v537 = vld [vmem:[#allocation2] sm:$0xff]
        %v538 = vld [vmem:[#allocation2 + $0x8] sm:$0xff]
        %v539 = vpack.c.bf16 %v535, %v533
        %v540 = vpack.c.bf16 %v536, %v534
        %v541 = vld [vmem:[%s314] sm:$0xf]
        %v542 = vld [vmem:[%s314 + $0x4] sm:$0xf]
        %v543 = vld [vmem:[%s314 + $0x8] sm:$0xf]
        %v544 = vld [vmem:[%s314 + $0xc] sm:$0xf]
        %v545 = vld [vmem:[%s314 + $0x10] sm:$0xf]
        %v546 = vld [vmem:[%s314 + $0x14] sm:$0xf]
        %v547 = vld [vmem:[%s314 + $0x18] sm:$0xf]
        %v548 = vld [vmem:[%s314 + $0x1c] sm:$0xf]
        %v549 = vld [vmem:[%s314 + $0x20] sm:$0xf]
        %v550 = vld [vmem:[%s314 + $0x24] sm:$0xf]
        %v551 = vld [vmem:[%s314 + $0x28] sm:$0xf]
        %v552 = vld [vmem:[%s314 + $0x2c] sm:$0xf]
        %v553 = vld [vmem:[%s314 + $0x30] sm:$0xf]
        %v554 = vld [vmem:[%s314 + $0x34] sm:$0xf]
        %v555 = vld [vmem:[%s314 + $0x38] sm:$0xf]
        %v556 = vld [vmem:[%s314 + $0x3c] sm:$0xf]
        %v557 = vld [vmem:[%s314 + $0x40] sm:$0xf]
        %v558 = vld [vmem:[%s314 + $0x44] sm:$0xf]
        %v559 = vld [vmem:[%s314 + $0x48] sm:$0xf]
        %v560 = vld [vmem:[%s314 + $0x4c] sm:$0xf]
        %v561 = vld [vmem:[%s314 + $0x50] sm:$0xf]
        %v562 = vld [vmem:[%s314 + $0x54] sm:$0xf]
        %v563 = vld [vmem:[%s314 + $0x58] sm:$0xf]
        %v564 = vld [vmem:[%s314 + $0x5c] sm:$0xf]
        %v565 = vld [vmem:[%s314 + $0x60] sm:$0xf]
        %v566 = vld [vmem:[%s314 + $0x64] sm:$0xf]
        %v567 = vld [vmem:[%s314 + $0x68] sm:$0xf]
        %v568 = vld [vmem:[%s314 + $0x6c] sm:$0xf]
        %v569 = vld [vmem:[%s314 + $0x70] sm:$0xf]
        %v570 = vld [vmem:[%s314 + $0x74] sm:$0xf]
        %v571 = vld [vmem:[%s314 + $0x78] sm:$0xf]
        %v572 = vld [vmem:[%s314 + $0x7c] sm:$0xf]
        %v605 = vunpack.c.l.b16 %v541
        %v606 = vunpack.c.l.b16 %v542
        %v607 = vunpack.c.l.b16 %v543
        %v608 = vunpack.c.l.b16 %v544
        %v609 = vunpack.c.l.b16 %v545
        %v610 = vunpack.c.l.b16 %v546
        %v611 = vunpack.c.l.b16 %v547
        %v612 = vunpack.c.l.b16 %v548
        %v613 = vunpack.c.l.b16 %v549
        %v614 = vunpack.c.l.b16 %v550
        %v615 = vunpack.c.l.b16 %v551
        %v616 = vunpack.c.l.b16 %v552
        %v617 = vunpack.c.l.b16 %v553
        %v618 = vunpack.c.l.b16 %v554
        %v619 = vunpack.c.l.b16 %v555
        %v620 = vunpack.c.l.b16 %v556
        %v621 = vunpack.c.l.b16 %v557
        %v622 = vunpack.c.l.b16 %v558
        %v623 = vunpack.c.l.b16 %v559
        %v624 = vunpack.c.l.b16 %v560
        %v625 = vunpack.c.l.b16 %v561
        %v626 = vunpack.c.l.b16 %v562
        %v627 = vunpack.c.l.b16 %v563
        %v628 = vunpack.c.l.b16 %v564
        %v629 = vunpack.c.l.b16 %v565
        %v630 = vunpack.c.l.b16 %v566
        %v631 = vunpack.c.l.b16 %v567
        %v632 = vunpack.c.l.b16 %v568
        %v633 = vunpack.c.l.b16 %v569
        %v634 = vunpack.c.l.b16 %v570
        %v635 = vunpack.c.l.b16 %v571
        %v636 = vunpack.c.l.b16 %v572
        %v637 = vpack.c.b16 %v606, %v605
        %v638 = vpack.c.b16 %v608, %v607
        %v639 = vpack.c.b16 %v610, %v609
        %v640 = vpack.c.b16 %v612, %v611
        %v641 = vpack.c.b16 %v614, %v613
        %v642 = vpack.c.b16 %v616, %v615
        %v643 = vpack.c.b16 %v618, %v617
        %v644 = vpack.c.b16 %v620, %v619
        %v645 = vpack.c.b16 %v622, %v621
        %v646 = vpack.c.b16 %v624, %v623
        %v647 = vpack.c.b16 %v626, %v625
        %v648 = vpack.c.b16 %v628, %v627
        %v649 = vpack.c.b16 %v630, %v629
        %v650 = vpack.c.b16 %v632, %v631
        %v651 = vpack.c.b16 %v634, %v633
        %v652 = vpack.c.b16 %v636, %v635
        %669 = vmatprep.subr.bf16.mxu0 0
        %670 = vmatpush1.bf16.msra.mxu0 %v644
        %671 = vmatprep.subr.bf16.mxu0 0
        %672 = vmatpush1.bf16.msra.mxu0 %v643
        %673 = vmatprep.subr.bf16.mxu0 0
        %674 = vmatpush1.bf16.msra.mxu0 %v642
        %675 = vmatprep.subr.bf16.mxu0 0
        %676 = vmatpush1.bf16.msra.mxu0 %v641
        %677 = vmatprep.subr.bf16.mxu0 0
        %678 = vmatpush1.bf16.msra.mxu0 %v640
        %679 = vmatprep.subr.bf16.mxu0 0
        %680 = vmatpush1.bf16.msra.mxu0 %v639
        %681 = vmatprep.subr.bf16.mxu0 0
        %682 = vmatpush1.bf16.msra.mxu0 %v638
        %683 = vmatprep.subr.bf16.mxu0 0
        %684 = vmatpush1.bf16.msra.mxu0 %v637
        %685 = vmatprep.subr.bf16.mxu0 0
        %686 = vmatpush2.bf16.msra.mxu0 %v652
        %687 = vmatprep.subr.bf16.mxu0 0
        %688 = vmatpush2.bf16.msra.mxu0 %v651
        %689 = vmatprep.subr.bf16.mxu0 0
        %690 = vmatpush2.bf16.msra.mxu0 %v650
        %691 = vmatprep.subr.bf16.mxu0 0
        %692 = vmatpush2.bf16.msra.mxu0 %v649
        %693 = vmatprep.subr.bf16.mxu0 0
        %694 = vmatpush2.bf16.msra.mxu0 %v648
        %695 = vmatprep.subr.bf16.mxu0 0
        %696 = vmatpush2.bf16.msra.mxu0 %v647
        %697 = vmatprep.subr.bf16.mxu0 0
        %698 = vmatpush2.bf16.msra.mxu0 %v646
        %699 = vmatprep.subr.bf16.mxu0 0
        %700 = vmatpush2.bf16.msra.mxu0 %v645
        %701 = vmatprep.mubr.bf16.mxu0 %v540
        %702 = vmatmul.mubr.bf16.gmra.mxu0 %v539
        %v703 = vpop.f32.mrf.mxu0
        %v704 = vadd.f32 0.0, %v703
        %v705 = vpop.f32.mrf.mxu0
        %v706 = vpop.f32.mrf.mxu0
        %v707 = vadd.f32 0.0, %v706
        %v708 = vpop.f32.mrf.mxu0
        %709 = vdwg.mxu0
        %v710 = vadd.f32 %v537, %v704
        %v711 = vadd.f32 %v538, %v707
        %712 = vst [vmem:[#allocation2] sm:$0xff] %v710
        %713 = vst [vmem:[#allocation2 + $0x8] sm:$0xff] %v711
        %p714 = scmp.eq.s32.totalorder %s29, 1
        // Predicated region
        $region61: #{tpu_custom_call.1} parent=39 // pred_check
          %p715 = pneg %p714
        $region62: #{tpu_custom_call.1} parent=39 // pred_check_branch
          %717 = sbr.rel (%p715) target = $region64
        $region63: #{tpu_custom_call.1} parent=39 // pred_region
          %v718 = vld [vmem:[#allocation2] sm:$0xff]
          %v719 = vld [vmem:[#allocation2 + $0x8] sm:$0xff]
          %v720 = vld [vmem:[%s4] sm:$0x1]
          %v722 = vlaneseq
          %v723 = vshrl.u32 %v722, 7
          %v724 = vsub.s32 0, %v723
          %v725 = vrot.slane %v720, %v724
          %v727 = vadd.f32 %v718, %v725
          %v728 = vadd.f32 %v719, %v725
          %729 = vst [vmem:[#allocation11] sm:$0xff] %v727
          %730 = vst [vmem:[#allocation11 + $0x8] sm:$0xff] %v728
        $region64: #{tpu_custom_call.1} parent=39 // pred_fallthru
          _
        // Predicated region
        $region65: #{tpu_custom_call.1} parent=39 // pred_check
          %p731 = pneg %p179
        $region66: #{tpu_custom_call.1} parent=39 // pred_check_branch
          %733 = sbr.rel (%p731) target = $region68
        $region67: #{tpu_custom_call.1} parent=39 // pred_region
          %s734 = smul.u32 2, %s28
          %s736 = ssub.s32 256, 256
          %737 = vsyncadd [#allocation5], %s736
          %s738 = smul.addr %s734, 128
          %s739 = scalar_lea.hbm %s5, %s738
          %s740 = sshll.u32 [#allocation11], 4
          %s741 = int_to_ptr.vmem [resolvable:$true] %s740
          %746 = dma.vmem_to_hbm [thread:$0]  %s741, 256, %s739, [#allocation5], 128, 128, 8
        $region68: #{tpu_custom_call.1} parent=39 // pred_fallthru
          _
        // Predicated region
        $region69: #{tpu_custom_call.1} parent=39 // pred_check
          %p747 = pneg %p179
        $region70: #{tpu_custom_call.1} parent=39 // pred_check_branch
          %749 = sbr.rel (%p747) target = $region72
        $region71: #{tpu_custom_call.1} parent=39 // pred_region
          %750 = dma.done [#allocation5], 256
        $region72: #{tpu_custom_call.1} parent=39 // pred_fallthru
          _
      $region40: #{tpu_custom_call.1} parent=5 // pred_fallthru
        _
      %p751 = scmp.le.s32.totalorder 2, %s19
      // Predicated region
      $region73: #{tpu_custom_call.1} parent=5 // pred_check
        %p752 = pneg %p751
      $region74: #{tpu_custom_call.1} parent=5 // pred_check_branch
        %754 = sbr.rel (%p752) target = $region76
      $region75: #{tpu_custom_call.1} parent=5 // pred_region
        %s755 = ssub.s32 %s19, 2
      $region76: #{tpu_custom_call.1} parent=5 // pred_fallthru
        _
    $region6: #{tpu_custom_call.1} parent=1 // loop_footer
      %s23 = sadd.s32 1, %s19
    $region7: #{tpu_custom_call.1} parent=1 // loop_footer_branch
      %18 = sbr.rel target = $region3
    $region8: #{tpu_custom_call.1} parent=1 // loop_exit
      _
    %756 = vsyncpa [#allocation4], 1
    %s757 = scalar_lea.sflag [#allocation4], 1
    %758 = vsyncpa %s757, 1
    %759 = vsyncpa [#allocation7], 1
    %s760 = scalar_lea.sflag [#allocation7], 1
    %761 = vsyncpa %s760, 1
    %762 = vsyncpa [#allocation10], 1
    %s763 = scalar_lea.sflag [#allocation10], 1
    %764 = vsyncpa %s763, 1
    %765 = vsyncpa [#allocation5], 1
    %s766 = scalar_lea.sflag [#allocation5], 1
    %767 = vsyncpa %s766, 1

</llo_original>
